<compile_context>
chip_gen: v5e
topology: v5e:2x2
jax: 0.10.0
libtpu: 0.0.40
codegen_flags: <defaults>
</compile_context>

<pallas_src>
import functools

import jax
import jax.numpy as jnp
import numpy as np
from jax.experimental import pallas as pl
from jax.experimental.pallas import tpu as pltpu


# ----------------------------------------------------------------------------
# Fused kernel: 3x GCNConv over all molecules (block-diag adjacency)
#               -> per-molecule min pool -> 2x GCNConv over the KG graph.
# ----------------------------------------------------------------------------
def _gcn_kgcn_kernel(num_mols, nodes_per_mol, out_ch,
                     x_ref, abd_ref, kgan_ref,
                     w1_ref, w2_ref, w3_ref, wk1_ref, wk2_ref, bias_ref,
                     o_ref):
    dot = functools.partial(jnp.dot, preferred_element_type=jnp.float32)

    x = x_ref[...]          # [M*N, Cin]  all molecules stacked node-major
    abd = abd_ref[...]      # [M*N, M*N]  block-diagonal normalized adjacency
    kgan = kgan_ref[...]    # [M, M]      normalized KG adjacency

    bias = bias_ref[...]                  # packed [8, 2*out]
    b1 = bias[0:1, :]                     # [1, 2*out]
    b2 = bias[1:2, :]                     # [1, 2*out]
    b3 = bias[2:3, :out_ch]               # [1, out]
    bk1 = bias[3:4, :]                    # [1, 2*out]
    bk2 = bias[4:5, :out_ch]              # [1, out]

    # ---- GCNMolGCN (shared weights, all molecules at once) ----
    h = jnp.maximum(dot(abd, dot(x, w1_ref[...])) + b1, 0.0)    # [M*N, 2*out]
    h = jnp.maximum(dot(abd, dot(h, w2_ref[...])) + b2, 0.0)    # [M*N, 2*out]
    h = dot(abd, dot(h, w3_ref[...])) + b3                      # [M*N, out]

    # ---- torch.min(out, dim=0).values per molecule ----
    z = jnp.min(h.reshape(num_mols, nodes_per_mol, out_ch), axis=1)   # [M, out]

    # ---- GCNKGCN over the knowledge graph ----
    g = jnp.maximum(dot(kgan, dot(z, wk1_ref[...])) + bk1, 0.0)        # [M, 2*out]
    o_ref[...] = dot(kgan, dot(g, wk2_ref[...])) + bk2                 # [M, out]


def gcn_kgcn_forward(x_mols, adj_blockdiag, kg_anorm, p):
    """x_mols: [M, N, Cin]; adj_blockdiag: [M*N, M*N]; kg_anorm: [M, M]."""
    M, N, Cin = x_mols.shape
    out_ch = p["w3"].shape[1]
    x_flat = x_mols.reshape(M * N, Cin)

    vmem = pl.BlockSpec(memory_space=pltpu.MemorySpace.VMEM)
    kernel = functools.partial(_gcn_kgcn_kernel, M, N, out_ch)
    return pl.pallas_call(
        kernel,
        in_specs=[vmem] * 9,
        out_specs=vmem,
        out_shape=jax.ShapeDtypeStruct((M, out_ch), jnp.float32),
    )(x_flat, adj_blockdiag, kg_anorm,
      p["w1"], p["w2"], p["w3"], p["wk1"], p["wk2"], p["bias_pack"])
    # NOTE: if this is ever scaled up (many molecules / big graphs), split the
    # molecule axis back into a grid with "parallel" semantics so both v7x
    # TensorCores get work, and keep the block-diag tile within ~32 MiB VMEM.


# ----------------------------------------------------------------------------
# Parameters / graphs / pure-JAX reference
# ----------------------------------------------------------------------------
def init_params(key, in_ch, out_ch):
    hid = 2 * out_ch
    ks = jax.random.split(key, 10)
    rnd = lambda k, sh: jax.random.normal(k, sh, jnp.float32) * 0.25
    p = {
        "w1": rnd(ks[0], (in_ch, hid)),   "b1": rnd(ks[1], (1, hid)),
        "w2": rnd(ks[2], (hid, hid)),     "b2": rnd(ks[3], (1, hid)),
        "w3": rnd(ks[4], (hid, out_ch)),  "b3": rnd(ks[5], (1, out_ch)),
        "wk1": rnd(ks[6], (out_ch, hid)), "bk1": rnd(ks[7], (1, hid)),
        "wk2": rnd(ks[8], (hid, out_ch)), "bk2": rnd(ks[9], (1, out_ch)),
    }
    pad = lambda b: jnp.pad(b, ((0, 0), (0, hid - b.shape[1])))
    p["bias_pack"] = jnp.concatenate(
        [p["b1"], p["b2"], pad(p["b3"]), p["bk1"], pad(p["bk2"]),
         jnp.zeros((3, hid), jnp.float32)], axis=0)          # [8, 2*out]
    return p


def ring_adj_no_self(n):
    a = np.zeros((n, n), dtype=np.float32)
    for u in range(n):
        v = (u + 1) % n
        a[u, v] = 1.0
        a[v, u] = 1.0
    return a


def gcn_norm(adj_no_self):
    """PyG gcn_norm: A_hat = A + I, D^-1/2 A_hat D^-1/2 (dense)."""
    n = adj_no_self.shape[0]
    a = adj_no_self + np.eye(n, dtype=np.float32)
    dinv = 1.0 / np.sqrt(a.sum(axis=1))
    return (dinv[:, None] * a) * dinv[None, :]


def block_diag(blocks):
    m, n, _ = blocks.shape
    out = np.zeros((m * n, m * n), dtype=np.float32)
    for i in range(m):
        out[i * n:(i + 1) * n, i * n:(i + 1) * n] = blocks[i]
    return out


def reference(x_mols, anorm_mols, kg_anorm, p):
    def mol(x, an):
        h = jnp.maximum(an @ (x @ p["w1"]) + p["b1"], 0.0)
        h = jnp.maximum(an @ (h @ p["w2"]) + p["b2"], 0.0)
        h = an @ (h @ p["w3"]) + p["b3"]
        return jnp.min(h, axis=0)

    z = jax.vmap(mol)(x_mols, anorm_mols)
    g = jnp.maximum(kg_anorm @ (z @ p["wk1"]) + p["bk1"], 0.0)
    return kg_anorm @ (g @ p["wk2"]) + p["bk2"]


if __name__ == "__main__":
    # Small shapes: 4 molecules x 8 atoms x 8 features, out_channels=8 (hidden=16).
    M, N, IN_CH, OUT_CH = 4, 8, 8, 8

    key = jax.random.PRNGKey(0)
    k_x, k_p = jax.random.split(key)
    x_mols = jax.random.normal(k_x, (M, N, IN_CH), jnp.float32)
    params = init_params(k_p, IN_CH, OUT_CH)

    # Molecule graphs (ring) + KG graph (ring over molecules), GCN-normalized.
    anorm_mols = np.stack([gcn_norm(ring_adj_no_self(N))] * M, axis=0)   # [M, N, N]
    adj_bd = jnp.asarray(block_diag(anorm_mols))                         # [M*N, M*N]
    kg_anorm = jnp.asarray(gcn_norm(ring_adj_no_self(M)))                # [M, M]

    out = jax.block_until_ready(gcn_kgcn_forward(x_mols, adj_bd, kg_anorm, params))

    ref = jax.block_until_ready(
        reference(x_mols, jnp.asarray(anorm_mols), kg_anorm, params))
    assert out.shape == (M, OUT_CH)
    np.testing.assert_allclose(np.asarray(out), np.asarray(ref), rtol=2e-3, atol=2e-3)

    # TODO(synk): sparse edge_index handling (GCNConv's internal gcn_norm over COO
    # edges) is done host-side as dense normalized adjacency; semantics identical.
    print("KERNEL_OK")
</pallas_src>

<mosaic_0001>
module attributes {stable_mosaic.version = 11 : i64} {
  func.func @_gcn_kgcn_kernel(%arg0: memref<32x8xf32, #tpu.memory_space<vmem>>, %arg1: memref<32x32xf32, #tpu.memory_space<vmem>>, %arg2: memref<4x4xf32, #tpu.memory_space<vmem>>, %arg3: memref<8x16xf32, #tpu.memory_space<vmem>>, %arg4: memref<16x16xf32, #tpu.memory_space<vmem>>, %arg5: memref<16x8xf32, #tpu.memory_space<vmem>>, %arg6: memref<8x16xf32, #tpu.memory_space<vmem>>, %arg7: memref<16x8xf32, #tpu.memory_space<vmem>>, %arg8: memref<8x16xf32, #tpu.memory_space<vmem>>, %arg9: memref<4x8xf32, #tpu.memory_space<vmem>>) attributes {dimension_semantics = [], scalar_prefetch = 0 : i64, scratch_operands = 0 : i64, tpu.core_type = #tpu.core_type<tc>} {
    %c0 = arith.constant 0 : index
    %c0_0 = arith.constant 0 : index
    %0 = vector.load %arg0[%c0, %c0_0] : memref<32x8xf32, #tpu.memory_space<vmem>>, vector<32x8xf32>
    %c0_1 = arith.constant 0 : index
    %c0_2 = arith.constant 0 : index
    %1 = vector.load %arg1[%c0_1, %c0_2] : memref<32x32xf32, #tpu.memory_space<vmem>>, vector<32x32xf32>
    %c0_3 = arith.constant 0 : index
    %c0_4 = arith.constant 0 : index
    %2 = vector.load %arg2[%c0_3, %c0_4] : memref<4x4xf32, #tpu.memory_space<vmem>>, vector<4x4xf32>
    %c0_5 = arith.constant 0 : index
    %c0_6 = arith.constant 0 : index
    %3 = vector.load %arg8[%c0_5, %c0_6] : memref<8x16xf32, #tpu.memory_space<vmem>>, vector<8x16xf32>
    %4 = vector.extract_strided_slice %3 {offsets = [0, 0], sizes = [1, 16], strides = [1, 1]} : vector<8x16xf32> to vector<1x16xf32>
    %5 = vector.extract_strided_slice %3 {offsets = [1, 0], sizes = [1, 16], strides = [1, 1]} : vector<8x16xf32> to vector<1x16xf32>
    %6 = vector.extract_strided_slice %3 {offsets = [2, 0], sizes = [1, 8], strides = [1, 1]} : vector<8x16xf32> to vector<1x8xf32>
    %7 = vector.extract_strided_slice %3 {offsets = [3, 0], sizes = [1, 16], strides = [1, 1]} : vector<8x16xf32> to vector<1x16xf32>
    %8 = vector.extract_strided_slice %3 {offsets = [4, 0], sizes = [1, 8], strides = [1, 1]} : vector<8x16xf32> to vector<1x8xf32>
    %c0_7 = arith.constant 0 : index
    %c0_8 = arith.constant 0 : index
    %9 = vector.load %arg3[%c0_7, %c0_8] : memref<8x16xf32, #tpu.memory_space<vmem>>, vector<8x16xf32>
    %cst = arith.constant dense<0.000000e+00> : vector<32x16xf32>
    %10 = tpu.matmul %0, %9, %cst {dimension_numbers = #tpu.dot_dimension_numbers<[1], [0], [0], [1], [0, 0, 1, 1], [], []>} : vector<32x8xf32>, vector<8x16xf32>, vector<32x16xf32> -> vector<32x16xf32>
    %cst_9 = arith.constant dense<0.000000e+00> : vector<32x16xf32>
    %11 = tpu.matmul %1, %10, %cst_9 {dimension_numbers = #tpu.dot_dimension_numbers<[1], [0], [0], [1], [0, 0, 1, 1], [], []>} : vector<32x32xf32>, vector<32x16xf32>, vector<32x16xf32> -> vector<32x16xf32>
    %12 = vector.broadcast %4 : vector<1x16xf32> to vector<32x16xf32>
    %13 = arith.addf %11, %12 : vector<32x16xf32>
    %cst_10 = arith.constant 0.000000e+00 : f32
    %14 = vector.broadcast %cst_10 : f32 to vector<32x16xf32>
    %15 = arith.maximumf %13, %14 : vector<32x16xf32>
    %c0_11 = arith.constant 0 : index
    %c0_12 = arith.constant 0 : index
    %16 = vector.load %arg4[%c0_11, %c0_12] : memref<16x16xf32, #tpu.memory_space<vmem>>, vector<16x16xf32>
    %cst_13 = arith.constant dense<0.000000e+00> : vector<32x16xf32>
    %17 = tpu.matmul %15, %16, %cst_13 {dimension_numbers = #tpu.dot_dimension_numbers<[1], [0], [0], [1], [0, 0, 1, 1], [], []>} : vector<32x16xf32>, vector<16x16xf32>, vector<32x16xf32> -> vector<32x16xf32>
    %cst_14 = arith.constant dense<0.000000e+00> : vector<32x16xf32>
    %18 = tpu.matmul %1, %17, %cst_14 {dimension_numbers = #tpu.dot_dimension_numbers<[1], [0], [0], [1], [0, 0, 1, 1], [], []>} : vector<32x32xf32>, vector<32x16xf32>, vector<32x16xf32> -> vector<32x16xf32>
    %19 = vector.broadcast %5 : vector<1x16xf32> to vector<32x16xf32>
    %20 = arith.addf %18, %19 : vector<32x16xf32>
    %cst_15 = arith.constant 0.000000e+00 : f32
    %21 = vector.broadcast %cst_15 : f32 to vector<32x16xf32>
    %22 = arith.maximumf %20, %21 : vector<32x16xf32>
    %c0_16 = arith.constant 0 : index
    %c0_17 = arith.constant 0 : index
    %23 = vector.load %arg5[%c0_16, %c0_17] : memref<16x8xf32, #tpu.memory_space<vmem>>, vector<16x8xf32>
    %cst_18 = arith.constant dense<0.000000e+00> : vector<32x8xf32>
    %24 = tpu.matmul %22, %23, %cst_18 {dimension_numbers = #tpu.dot_dimension_numbers<[1], [0], [0], [1], [0, 0, 1, 1], [], []>} : vector<32x16xf32>, vector<16x8xf32>, vector<32x8xf32> -> vector<32x8xf32>
    %cst_19 = arith.constant dense<0.000000e+00> : vector<32x8xf32>
    %25 = tpu.matmul %1, %24, %cst_19 {dimension_numbers = #tpu.dot_dimension_numbers<[1], [0], [0], [1], [0, 0, 1, 1], [], []>} : vector<32x32xf32>, vector<32x8xf32>, vector<32x8xf32> -> vector<32x8xf32>
    %26 = vector.broadcast %6 : vector<1x8xf32> to vector<32x8xf32>
    %27 = arith.addf %25, %26 : vector<32x8xf32>
    %28 = vector.shape_cast %27 : vector<32x8xf32> to vector<4x8x8xf32>
    %cst_20 = arith.constant dense<0x7F800000> : vector<4x8xf32>
    %29 = vector.multi_reduction <minimumf>, %28, %cst_20 [1] : vector<4x8x8xf32> to vector<4x8xf32>
    %c0_21 = arith.constant 0 : index
    %c0_22 = arith.constant 0 : index
    %30 = vector.load %arg6[%c0_21, %c0_22] : memref<8x16xf32, #tpu.memory_space<vmem>>, vector<8x16xf32>
    %cst_23 = arith.constant dense<0.000000e+00> : vector<4x16xf32>
    %31 = tpu.matmul %29, %30, %cst_23 {dimension_numbers = #tpu.dot_dimension_numbers<[1], [0], [0], [1], [0, 0, 1, 1], [], []>} : vector<4x8xf32>, vector<8x16xf32>, vector<4x16xf32> -> vector<4x16xf32>
    %cst_24 = arith.constant dense<0.000000e+00> : vector<4x16xf32>
    %32 = tpu.matmul %2, %31, %cst_24 {dimension_numbers = #tpu.dot_dimension_numbers<[1], [0], [0], [1], [0, 0, 1, 1], [], []>} : vector<4x4xf32>, vector<4x16xf32>, vector<4x16xf32> -> vector<4x16xf32>
    %33 = vector.broadcast %7 : vector<1x16xf32> to vector<4x16xf32>
    %34 = arith.addf %32, %33 : vector<4x16xf32>
    %cst_25 = arith.constant 0.000000e+00 : f32
    %35 = vector.broadcast %cst_25 : f32 to vector<4x16xf32>
    %36 = arith.maximumf %34, %35 : vector<4x16xf32>
    %c0_26 = arith.constant 0 : index
    %c0_27 = arith.constant 0 : index
    %37 = vector.load %arg7[%c0_26, %c0_27] : memref<16x8xf32, #tpu.memory_space<vmem>>, vector<16x8xf32>
    %cst_28 = arith.constant dense<0.000000e+00> : vector<4x8xf32>
    %38 = tpu.matmul %36, %37, %cst_28 {dimension_numbers = #tpu.dot_dimension_numbers<[1], [0], [0], [1], [0, 0, 1, 1], [], []>} : vector<4x16xf32>, vector<16x8xf32>, vector<4x8xf32> -> vector<4x8xf32>
    %cst_29 = arith.constant dense<0.000000e+00> : vector<4x8xf32>
    %39 = tpu.matmul %2, %38, %cst_29 {dimension_numbers = #tpu.dot_dimension_numbers<[1], [0], [0], [1], [0, 0, 1, 1], [], []>} : vector<4x4xf32>, vector<4x8xf32>, vector<4x8xf32> -> vector<4x8xf32>
    %40 = vector.broadcast %8 : vector<1x8xf32> to vector<4x8xf32>
    %41 = arith.addf %39, %40 : vector<4x8xf32>
    %c0_30 = arith.constant 0 : index
    %c0_31 = arith.constant 0 : index
    %42 = vector.load %arg9[%c0_30, %c0_31] : memref<4x8xf32, #tpu.memory_space<vmem>>, vector<4x8xf32>
    tpu.vector_store %arg9[%c0_30, %c0_31], %41 {strides = array<i32>} : memref<4x8xf32, #tpu.memory_space<vmem>>, vector<4x8xf32>,
    return
  }
}

</mosaic_0001>

<llo_original>
// kernel: tpu_custom_call.1
$region0: #{tpu_custom_call.1}
  #allocation0 [shape = 'u32[]', space=smem, size = 0x4, offset = 0x4, fixed_abs, tag = 'smem constant byte address 0x4 - core index']
  #allocation1 [shape = 'u32[72,128]{1,0:T(1,128)}', space=vmem, size = 0x9000, scoped, tag = 'internal scratch']
  %s0 = inlined_call_operand.vmem [shape: f32[32,8], index: 0, kind: input, shape index: {}]
  %s1 = inlined_call_operand.vmem [shape: f32[32,32], index: 1, kind: input, shape index: {}]
  %s2 = inlined_call_operand.hbm [shape: f32[4,4], index: 2, kind: input, shape index: {}]
  %s3 = inlined_call_operand.vmem [shape: f32[8,16], index: 3, kind: input, shape index: {}]
  %s4 = inlined_call_operand.vmem [shape: f32[16,16], index: 4, kind: input, shape index: {}]
  %s5 = inlined_call_operand.vmem [shape: f32[16,8], index: 5, kind: input, shape index: {}]
  %s6 = inlined_call_operand.vmem [shape: f32[8,16], index: 6, kind: input, shape index: {}]
  %s7 = inlined_call_operand.vmem [shape: f32[16,8], index: 7, kind: input, shape index: {}]
  %s8 = inlined_call_operand.vmem [shape: f32[8,16], index: 8, kind: input, shape index: {}]
  %s9 = inlined_call_operand.hbm [shape: f32[4,8], index: 9, kind: output, shape index: {}]
  %s10 = sld [smem:[#allocation0]]
  $region50: #{tpu_custom_call.1} parent=0
    _
  %s12 = ssub.s32 1, %s10
  %s13 = scalar_select 0, %s12, %s10
  $region1: #{tpu_custom_call.1} parent=0
    #allocation2 [shape = 'u8[2048]{0}', space=vmem, size = 0x800, scoped, tag = 'input window, operand 2, single buffered']
    #allocation3 [shape = 's32[1]{0}', space=sflag, size = 0x4, scoped, tag = 'scoped memory for tpu_custom_call.1']
    #allocation4 [shape = 's32[1]{0}', space=sflag, size = 0x4, scoped, tag = 'scoped memory for tpu_custom_call.1']
    #allocation5 [shape = 'u8[2048]{0}', space=vmem, size = 0x800, scoped, tag = 'output window, operand 0, single buffered']
    %14 = vsyncpa [#allocation3], 0
    %15 = vsyncpa [#allocation4], 0
    // Predicated region
    $region2: #{tpu_custom_call.1} parent=1 // pred_check
      _
    $region3: #{tpu_custom_call.1} parent=1 // pred_check_branch
      %17 = sbr.rel (0) target = $region5
    $region4: #{tpu_custom_call.1} parent=1 // pred_region
      _
    $region5: #{tpu_custom_call.1} parent=1 // pred_fallthru
      _
    // Predicated region
    $region6: #{tpu_custom_call.1} parent=1 // pred_check
      _
    $region7: #{tpu_custom_call.1} parent=1 // pred_check_branch
      %19 = sbr.rel (0) target = $region9
    $region8: #{tpu_custom_call.1} parent=1 // pred_region
      _
    $region9: #{tpu_custom_call.1} parent=1 // pred_fallthru
      _
    // Predicated region
    $region10: #{tpu_custom_call.1} parent=1 // pred_check
      _
    $region11: #{tpu_custom_call.1} parent=1 // pred_check_branch
      %21 = sbr.rel (0) target = $region13
    $region12: #{tpu_custom_call.1} parent=1 // pred_region
      %23 = vsyncadd [#allocation3], 0
      %s25 = sshll.u32 %s2, 4
      %s26 = int_to_ptr.hbm [resolvable:$true] %s25
      %s27 = sshll.u32 [#allocation2], 4
      %s28 = int_to_ptr.vmem [resolvable:$true] %s27
      %30 = dma.hbm_to_vmem [thread:$0]  %s26, 64, %s28, [#allocation3]
    $region13: #{tpu_custom_call.1} parent=1 // pred_fallthru
      _
    // Predicated region
    $region14: #{tpu_custom_call.1} parent=1 // pred_check
      _
    $region15: #{tpu_custom_call.1} parent=1 // pred_check_branch
      %32 = sbr.rel (0) target = $region17
    $region16: #{tpu_custom_call.1} parent=1 // pred_region
      _
    $region17: #{tpu_custom_call.1} parent=1 // pred_fallthru
      _
    // Predicated region
    $region18: #{tpu_custom_call.1} parent=1 // pred_check
      _
    $region19: #{tpu_custom_call.1} parent=1 // pred_check_branch
      %34 = sbr.rel (0) target = $region21
    $region20: #{tpu_custom_call.1} parent=1 // pred_region
      _
    $region21: #{tpu_custom_call.1} parent=1 // pred_fallthru
      _
    // Predicated region
    $region22: #{tpu_custom_call.1} parent=1 // pred_check
      _
    $region23: #{tpu_custom_call.1} parent=1 // pred_check_branch
      %36 = sbr.rel (0) target = $region25
    $region24: #{tpu_custom_call.1} parent=1 // pred_region
      _
    $region25: #{tpu_custom_call.1} parent=1 // pred_fallthru
      _
    // Predicated region
    $region26: #{tpu_custom_call.1} parent=1 // pred_check
      _
    $region27: #{tpu_custom_call.1} parent=1 // pred_check_branch
      %38 = sbr.rel (0) target = $region29
    $region28: #{tpu_custom_call.1} parent=1 // pred_region
      _
    $region29: #{tpu_custom_call.1} parent=1 // pred_fallthru
      _
    // Predicated region
    $region30: #{tpu_custom_call.1} parent=1 // pred_check
      _
    $region31: #{tpu_custom_call.1} parent=1 // pred_check_branch
      %40 = sbr.rel (0) target = $region33
    $region32: #{tpu_custom_call.1} parent=1 // pred_region
      _
    $region33: #{tpu_custom_call.1} parent=1 // pred_fallthru
      _
    // Predicated region
    $region34: #{tpu_custom_call.1} parent=1 // pred_check
      _
    $region35: #{tpu_custom_call.1} parent=1 // pred_check_branch
      %42 = sbr.rel (0) target = $region37
    $region36: #{tpu_custom_call.1} parent=1 // pred_region
      _
    $region37: #{tpu_custom_call.1} parent=1 // pred_fallthru
      _
    // Predicated region
    $region38: #{tpu_custom_call.1} parent=1 // pred_check
      _
    $region39: #{tpu_custom_call.1} parent=1 // pred_check_branch
      %44 = sbr.rel (0) target = $region41
    $region40: #{tpu_custom_call.1} parent=1 // pred_region
      %46 = dma.done [#allocation3], 64
    $region41: #{tpu_custom_call.1} parent=1 // pred_fallthru
      _
    %v47 = vld [vmem:[%s0] sm:$0xff]
    %v48 = vld [vmem:[%s0 + $0x8] sm:$0xff]
    %v49 = vld [vmem:[%s0 + $0x10] sm:$0xff]
    %v50 = vld [vmem:[%s0 + $0x18] sm:$0xff]
    %v51 = vld [vmem:[%s1] sm:$0xff]
    %v52 = vld [vmem:[%s1 + $0x8] sm:$0xff]
    %v53 = vld [vmem:[%s1 + $0x10] sm:$0xff]
    %v54 = vld [vmem:[%s1 + $0x18] sm:$0xff]
    %v55 = vld [vmem:[#allocation2] sm:$0xf]
    %v56 = vld [vmem:[%s8] sm:$0xff]
    %v57 = vld [vmem:[%s3] sm:$0xff]
    %vm58 = vcmask 64512
    %v60 = vsel %vm58, %v47, 0
    %v63 = vsel %vm58, %v48, 0
    %v66 = vsel %vm58, %v49, 0
    %v69 = vsel %vm58, %v50, 0
    %71 = vmatpush.msra.mxu0 0.0
    %72 = vmatpush.msra.mxu0 0.0
    %73 = vmatpush.msra.mxu0 0.0
    %74 = vmatpush.msra.mxu0 0.0
    %75 = vmatpush.msra.mxu0 0.0
    %76 = vmatpush.msra.mxu0 0.0
    %77 = vmatpush.msra.mxu0 0.0
    %78 = vmatpush.msra.mxu0 0.0
    %79 = vmatpush.msra.mxu0 0.0
    %80 = vmatpush.msra.mxu0 0.0
    %81 = vmatpush.msra.mxu0 0.0
    %82 = vmatpush.msra.mxu0 0.0
    %83 = vmatpush.msra.mxu0 0.0
    %84 = vmatpush.msra.mxu0 0.0
    %85 = vmatpush.msra.mxu0 0.0
    %86 = vmatpush.msra.mxu0 %v57
    %87 = vmatmul.f32.gmra.mxu0 %v60
    %v88 = vpop.f32.mrf.mxu0
    %v89 = vadd.f32 0.0, %v88
    %90 = vmatmul.f32.gmra.mxu0 %v63
    %v91 = vpop.f32.mrf.mxu0
    %v92 = vadd.f32 0.0, %v91
    %93 = vmatmul.f32.gmra.mxu0 %v66
    %v94 = vpop.f32.mrf.mxu0
    %v95 = vadd.f32 0.0, %v94
    %96 = vmatmul.f32.gmra.mxu0 %v69
    %v97 = vpop.f32.mrf.mxu0
    %v98 = vadd.f32 0.0, %v97
    %99 = vdwg.mxu0
    %v100 = vperm.slane %v56, 0
    %vm101 = vcmask 261120
    %v103 = vsel %vm101, %v51, 0
    %v106 = vsel %vm101, %v52, 0
    %v109 = vsel %vm101, %v53, 0
    %v112 = vsel %vm101, %v54, 0
    %114 = vmatpush.msra.mxu0 0.0
    %115 = vmatpush.msra.mxu0 0.0
    %116 = vmatpush.msra.mxu0 0.0
    %117 = vmatpush.msra.mxu0 0.0
    %118 = vmatpush.msra.mxu0 0.0
    %119 = vmatpush.msra.mxu0 0.0
    %120 = vmatpush.msra.mxu0 0.0
    %121 = vmatpush.msra.mxu0 0.0
    %122 = vmatpush.msra.mxu0 0.0
    %123 = vmatpush.msra.mxu0 0.0
    %124 = vmatpush.msra.mxu0 0.0
    %125 = vmatpush.msra.mxu0 0.0
    %126 = vmatpush.msra.mxu0 %v98
    %127 = vmatpush.msra.mxu0 %v95
    %128 = vmatpush.msra.mxu0 %v92
    %129 = vmatpush.msra.mxu0 %v89
    %130 = vmatmul.f32.gmra.mxu0 %v103
    %v131 = vpop.f32.mrf.mxu0
    %v132 = vadd.f32 %v100, %v131
    %133 = vmatmul.f32.gmra.mxu0 %v106
    %v134 = vpop.f32.mrf.mxu0
    %v135 = vadd.f32 %v100, %v134
    %136 = vmatmul.f32.gmra.mxu0 %v109
    %v137 = vpop.f32.mrf.mxu0
    %v138 = vadd.f32 %v100, %v137
    %139 = vmatmul.f32.gmra.mxu0 %v112
    %v140 = vpop.f32.mrf.mxu0
    %v141 = vadd.f32 %v100, %v140
    %142 = vdwg.mxu0
    %v143 = vmax.f32 %v132, 0.0
    %v144 = vmax.f32 %v135, 0.0
    %v145 = vmax.f32 %v138, 0.0
    %v146 = vmax.f32 %v141, 0.0
    %v147 = vld [vmem:[%s4] sm:$0xff]
    %v148 = vld [vmem:[%s4 + $0x8] sm:$0xff]
    %vm149 = vcmask 130048
    %v151 = vsel %vm149, %v143, 0
    %v154 = vsel %vm149, %v144, 0
    %v157 = vsel %vm149, %v145, 0
    %v160 = vsel %vm149, %v146, 0
    %162 = vmatpush.msra.mxu0 0.0
    %163 = vmatpush.msra.mxu0 0.0
    %164 = vmatpush.msra.mxu0 0.0
    %165 = vmatpush.msra.mxu0 0.0
    %166 = vmatpush.msra.mxu0 0.0
    %167 = vmatpush.msra.mxu0 0.0
    %168 = vmatpush.msra.mxu0 0.0
    %169 = vmatpush.msra.mxu0 0.0
    %170 = vmatpush.msra.mxu0 0.0
    %171 = vmatpush.msra.mxu0 0.0
    %172 = vmatpush.msra.mxu0 0.0
    %173 = vmatpush.msra.mxu0 0.0
    %174 = vmatpush.msra.mxu0 0.0
    %175 = vmatpush.msra.mxu0 0.0
    %176 = vmatpush.msra.mxu0 %v148
    %177 = vmatpush.msra.mxu0 %v147
    %178 = vmatmul.f32.gmra.mxu0 %v151
    %v179 = vpop.f32.mrf.mxu0
    %v180 = vadd.f32 0.0, %v179
    %181 = vmatmul.f32.gmra.mxu0 %v154
    %v182 = vpop.f32.mrf.mxu0
    %v183 = vadd.f32 0.0, %v182
    %184 = vmatmul.f32.gmra.mxu0 %v157
    %v185 = vpop.f32.mrf.mxu0
    %v186 = vadd.f32 0.0, %v185
    %187 = vmatmul.f32.gmra.mxu0 %v160
    %v188 = vpop.f32.mrf.mxu0
    %v189 = vadd.f32 0.0, %v188
    %190 = vdwg.mxu0
    %v191 = vperm.slane %v56, 1
    %192 = vmatpush.msra.mxu0 0.0
    %193 = vmatpush.msra.mxu0 0.0
    %194 = vmatpush.msra.mxu0 0.0
    %195 = vmatpush.msra.mxu0 0.0
    %196 = vmatpush.msra.mxu0 0.0
    %197 = vmatpush.msra.mxu0 0.0
    %198 = vmatpush.msra.mxu0 0.0
    %199 = vmatpush.msra.mxu0 0.0
    %200 = vmatpush.msra.mxu0 0.0
    %201 = vmatpush.msra.mxu0 0.0
    %202 = vmatpush.msra.mxu0 0.0
    %203 = vmatpush.msra.mxu0 0.0
    %204 = vmatpush.msra.mxu0 %v189
    %205 = vmatpush.msra.mxu0 %v186
    %206 = vmatpush.msra.mxu0 %v183
    %207 = vmatpush.msra.mxu0 %v180
    %208 = vmatmul.f32.gmra.mxu0 %v103
    %v209 = vpop.f32.mrf.mxu0
    %v210 = vadd.f32 %v191, %v209
    %211 = vmatmul.f32.gmra.mxu0 %v106
    %v212 = vpop.f32.mrf.mxu0
    %v213 = vadd.f32 %v191, %v212
    %214 = vmatmul.f32.gmra.mxu0 %v109
    %v215 = vpop.f32.mrf.mxu0
    %v216 = vadd.f32 %v191, %v215
    %217 = vmatmul.f32.gmra.mxu0 %v112
    %v218 = vpop.f32.mrf.mxu0
    %v219 = vadd.f32 %v191, %v218
    %220 = vdwg.mxu0
    %v221 = vmax.f32 %v210, 0.0
    %v222 = vmax.f32 %v213, 0.0
    %v223 = vmax.f32 %v216, 0.0
    %v224 = vmax.f32 %v219, 0.0
    %v225 = vld [vmem:[%s5] sm:$0xff]
    %v226 = vld [vmem:[%s5 + $0x8] sm:$0xff]
    %v228 = vsel %vm149, %v221, 0
    %v231 = vsel %vm149, %v222, 0
    %v234 = vsel %vm149, %v223, 0
    %v237 = vsel %vm149, %v224, 0
    %239 = vmatpush.msra.mxu0 0.0
    %240 = vmatpush.msra.mxu0 0.0
    %241 = vmatpush.msra.mxu0 0.0
    %242 = vmatpush.msra.mxu0 0.0
    %243 = vmatpush.msra.mxu0 0.0
    %244 = vmatpush.msra.mxu0 0.0
    %245 = vmatpush.msra.mxu0 0.0
    %246 = vmatpush.msra.mxu0 0.0
    %247 = vmatpush.msra.mxu0 0.0
    %248 = vmatpush.msra.mxu0 0.0
    %249 = vmatpush.msra.mxu0 0.0
    %250 = vmatpush.msra.mxu0 0.0
    %251 = vmatpush.msra.mxu0 0.0
    %252 = vmatpush.msra.mxu0 0.0
    %253 = vmatpush.msra.mxu0 %v226
    %254 = vmatpush.msra.mxu0 %v225
    %255 = vmatmul.f32.gmra.mxu0 %v228
    %v256 = vpop.f32.mrf.mxu0
    %v257 = vadd.f32 0.0, %v256
    %258 = vmatmul.f32.gmra.mxu0 %v231
    %v259 = vpop.f32.mrf.mxu0
    %v260 = vadd.f32 0.0, %v259
    %261 = vmatmul.f32.gmra.mxu0 %v234
    %v262 = vpop.f32.mrf.mxu0
    %v263 = vadd.f32 0.0, %v262
    %264 = vmatmul.f32.gmra.mxu0 %v237
    %v265 = vpop.f32.mrf.mxu0
    %v266 = vadd.f32 0.0, %v265
    %267 = vdwg.mxu0
    %v268 = vperm.slane %v56, 2
    %269 = vmatpush.msra.mxu0 0.0
    %270 = vmatpush.msra.mxu0 0.0
    %271 = vmatpush.msra.mxu0 0.0
    %272 = vmatpush.msra.mxu0 0.0
    %273 = vmatpush.msra.mxu0 0.0
    %274 = vmatpush.msra.mxu0 0.0
    %275 = vmatpush.msra.mxu0 0.0
    %276 = vmatpush.msra.mxu0 0.0
    %277 = vmatpush.msra.mxu0 0.0
    %278 = vmatpush.msra.mxu0 0.0
    %279 = vmatpush.msra.mxu0 0.0
    %280 = vmatpush.msra.mxu0 0.0
    %281 = vmatpush.msra.mxu0 %v266
    %282 = vmatpush.msra.mxu0 %v263
    %283 = vmatpush.msra.mxu0 %v260
    %284 = vmatpush.msra.mxu0 %v257
    %285 = vmatmul.f32.gmra.mxu0 %v103
    %v286 = vpop.f32.mrf.mxu0
    %v287 = vadd.f32 %v268, %v286
    %288 = vmatmul.f32.gmra.mxu0 %v106
    %v289 = vpop.f32.mrf.mxu0
    %v290 = vadd.f32 %v268, %v289
    %291 = vmatmul.f32.gmra.mxu0 %v109
    %v292 = vpop.f32.mrf.mxu0
    %v293 = vadd.f32 %v268, %v292
    %294 = vmatmul.f32.gmra.mxu0 %v112
    %v295 = vpop.f32.mrf.mxu0
    %v296 = vadd.f32 %v268, %v295
    %297 = vdwg.mxu0
    %v298 = vsel %vm58, %v287, inf
    %v299 = vrot.slane %v298, 4
    %v300 = vmin.f32 %v298, %v299
    %v301 = vrot.slane %v300, 2
    %v302 = vmin.f32 %v300, %v301
    %v303 = vrot.slane %v302, 1
    %v304 = vmin.f32 %v302, %v303
    %v305 = vsel %vm58, %v290, inf
    %v306 = vrot.slane %v305, 4
    %v307 = vmin.f32 %v305, %v306
    %v308 = vrot.slane %v307, 2
    %v309 = vmin.f32 %v307, %v308
    %v310 = vrot.slane %v309, 1
    %v311 = vmin.f32 %v309, %v310
    %v312 = vsel %vm58, %v293, inf
    %v313 = vrot.slane %v312, 4
    %v314 = vmin.f32 %v312, %v313
    %v315 = vrot.slane %v314, 2
    %v316 = vmin.f32 %v314, %v315
    %v317 = vrot.slane %v316, 1
    %v318 = vmin.f32 %v316, %v317
    %v319 = vsel %vm58, %v296, inf
    %v320 = vrot.slane %v319, 4
    %v321 = vmin.f32 %v319, %v320
    %v322 = vrot.slane %v321, 2
    %v323 = vmin.f32 %v321, %v322
    %v324 = vrot.slane %v323, 1
    %v325 = vmin.f32 %v323, %v324
    %v326 = vld [vmem:[%s6] sm:$0xff]
    %vm331 = vcmask 1041409
    %v332 = vsel %vm331, %v311, %v304
    %vm333 = vcmask 1042434
    %v334 = vsel %vm333, %v318, %v332
    %vm335 = vcmask 1043459
    %v336 = vsel %vm335, %v325, %v334
    %v337 = vsel %vm58, %v336, 0
    %339 = vmatpush.msra.mxu0 0.0
    %340 = vmatpush.msra.mxu0 0.0
    %341 = vmatpush.msra.mxu0 0.0
    %342 = vmatpush.msra.mxu0 0.0
    %343 = vmatpush.msra.mxu0 0.0
    %344 = vmatpush.msra.mxu0 0.0
    %345 = vmatpush.msra.mxu0 0.0
    %346 = vmatpush.msra.mxu0 0.0
    %347 = vmatpush.msra.mxu0 0.0
    %348 = vmatpush.msra.mxu0 0.0
    %349 = vmatpush.msra.mxu0 0.0
    %350 = vmatpush.msra.mxu0 0.0
    %351 = vmatpush.msra.mxu0 0.0
    %352 = vmatpush.msra.mxu0 0.0
    %353 = vmatpush.msra.mxu0 0.0
    %354 = vmatpush.msra.mxu0 %v326
    %355 = vmatmul.f32.gmra.mxu0 %v337
    %v356 = vpop.f32.mrf.mxu0
    %v357 = vadd.f32 0.0, %v356
    %358 = vdwg.mxu0
    %v359 = vperm.slane %v56, 3
    %vm360 = vcmask 31744
    %v362 = vsel %vm360, %v55, 0
    %vm364 = vcmask 1043456
    %v366 = vsel %vm364, %v357, 0
    %368 = vmatpush.msra.mxu0 0.0
    %369 = vmatpush.msra.mxu0 0.0
    %370 = vmatpush.msra.mxu0 0.0
    %371 = vmatpush.msra.mxu0 0.0
    %372 = vmatpush.msra.mxu0 0.0
    %373 = vmatpush.msra.mxu0 0.0
    %374 = vmatpush.msra.mxu0 0.0
    %375 = vmatpush.msra.mxu0 0.0
    %376 = vmatpush.msra.mxu0 0.0
    %377 = vmatpush.msra.mxu0 0.0
    %378 = vmatpush.msra.mxu0 0.0
    %379 = vmatpush.msra.mxu0 0.0
    %380 = vmatpush.msra.mxu0 0.0
    %381 = vmatpush.msra.mxu0 0.0
    %382 = vmatpush.msra.mxu0 0.0
    %383 = vmatpush.msra.mxu0 %v366
    %384 = vmatmul.f32.gmra.mxu0 %v362
    %v385 = vpop.f32.mrf.mxu0
    %v386 = vadd.f32 %v359, %v385
    %387 = vdwg.mxu0
    %v388 = vmax.f32 %v386, 0.0
    %v389 = vld [vmem:[%s7] sm:$0xff]
    %v390 = vld [vmem:[%s7 + $0x8] sm:$0xff]
    %v392 = vsel %vm149, %v388, 0
    %394 = vmatpush.msra.mxu0 0.0
    %395 = vmatpush.msra.mxu0 0.0
    %396 = vmatpush.msra.mxu0 0.0
    %397 = vmatpush.msra.mxu0 0.0
    %398 = vmatpush.msra.mxu0 0.0
    %399 = vmatpush.msra.mxu0 0.0
    %400 = vmatpush.msra.mxu0 0.0
    %401 = vmatpush.msra.mxu0 0.0
    %402 = vmatpush.msra.mxu0 0.0
    %403 = vmatpush.msra.mxu0 0.0
    %404 = vmatpush.msra.mxu0 0.0
    %405 = vmatpush.msra.mxu0 0.0
    %406 = vmatpush.msra.mxu0 0.0
    %407 = vmatpush.msra.mxu0 0.0
    %408 = vmatpush.msra.mxu0 %v390
    %409 = vmatpush.msra.mxu0 %v389
    %410 = vmatmul.f32.gmra.mxu0 %v392
    %v411 = vpop.f32.mrf.mxu0
    %v412 = vadd.f32 0.0, %v411
    %413 = vdwg.mxu0
    %v414 = vperm.slane %v56, 4
    %v416 = vsel %vm364, %v412, 0
    %418 = vmatpush.msra.mxu0 0.0
    %419 = vmatpush.msra.mxu0 0.0
    %420 = vmatpush.msra.mxu0 0.0
    %421 = vmatpush.msra.mxu0 0.0
    %422 = vmatpush.msra.mxu0 0.0
    %423 = vmatpush.msra.mxu0 0.0
    %424 = vmatpush.msra.mxu0 0.0
    %425 = vmatpush.msra.mxu0 0.0
    %426 = vmatpush.msra.mxu0 0.0
    %427 = vmatpush.msra.mxu0 0.0
    %428 = vmatpush.msra.mxu0 0.0
    %429 = vmatpush.msra.mxu0 0.0
    %430 = vmatpush.msra.mxu0 0.0
    %431 = vmatpush.msra.mxu0 0.0
    %432 = vmatpush.msra.mxu0 0.0
    %433 = vmatpush.msra.mxu0 %v416
    %434 = vmatmul.f32.gmra.mxu0 %v362
    %v435 = vpop.f32.mrf.mxu0
    %v436 = vadd.f32 %v414, %v435
    %437 = vdwg.mxu0
    %vm438 = vcmask 60416
    %439 = vst.msk [vmem:[#allocation5] sm:$0xf] %vm438, %v436
    // Predicated region
    $region42: #{tpu_custom_call.1} parent=1 // pred_check
      _
    $region43: #{tpu_custom_call.1} parent=1 // pred_check_branch
      %441 = sbr.rel (0) target = $region45
    $region44: #{tpu_custom_call.1} parent=1 // pred_region
      %443 = vsyncadd [#allocation4], 0
      %s445 = sshll.u32 [#allocation5], 4
      %s446 = int_to_ptr.vmem [resolvable:$true] %s445
      %s447 = sshll.u32 %s9, 4
      %s448 = int_to_ptr.hbm [resolvable:$true] %s447
      %450 = dma.vmem_to_hbm [thread:$0]  %s446, 64, %s448, [#allocation4]
    $region45: #{tpu_custom_call.1} parent=1 // pred_fallthru
      _
    // Predicated region
    $region46: #{tpu_custom_call.1} parent=1 // pred_check
      _
    $region47: #{tpu_custom_call.1} parent=1 // pred_check_branch
      %452 = sbr.rel (0) target = $region49
    $region48: #{tpu_custom_call.1} parent=1 // pred_region
      %454 = dma.done [#allocation4], 64
    $region49: #{tpu_custom_call.1} parent=1 // pred_fallthru
      _
    %455 = vsyncpa [#allocation3], 1
    %456 = vsyncpa [#allocation4], 1

</llo_original>
